<compile_context>
chip_gen: v5e
topology: v5e:2x2
jax: 0.10.0
libtpu: 0.0.40
codegen_flags: <defaults>
</compile_context>

<pallas_src>
import functools

import numpy as np
import jax
import jax.numpy as jnp
from jax.experimental import pallas as pl
from jax.experimental.pallas import tpu as pltpu


def _round_up(a, b):
    return ((a + b - 1) // b) * b


def _cdiv(a, b):
    return (a + b - 1) // b


def _quanv_fused_kernel(patch_ref, wbd_ref, onesbd_ref, out_ref):
    """One grid step == (one batch element) x (one lane-tile of patches), all channels fused.

    patch_ref:  (CKp, p_t) VMEM, transport dtype — patch elements on sublanes
                (c-major, k-minor, zero-padded to CKp), patches lane-dense.
    wbd_ref:    (CQp, CKp) VMEM, transport dtype — block-diagonal surrogate
                quantum weights (block c = W[c].T): one MXU matmul covers
                every channel.
    onesbd_ref: (CQp, CKp) VMEM, transport dtype — block-diagonal ones;
                (ones_bd @ patch^2) yields each patch's per-channel sum of
                squares already broadcast over that channel's Q output rows.
    out_ref:    (CQp, p_t) VMEM f32 — lane-dense stores.
    """
    patch = patch_ref[...]

    # Angle mix for every channel in a single block-diagonal matmul (fast MXU
    # path when transport is bf16), accumulated in f32.
    z = jnp.dot(wbd_ref[...], patch, preferred_element_type=jnp.float32)

    # Per-(channel, patch) sum of squares, broadcast across that channel's Q
    # output rows.  Squaring stays in the transport dtype so this matmul also
    # uses the fast MXU path; accumulation is f32.
    sq = jnp.dot(onesbd_ref[...], patch * patch,
                 preferred_element_type=jnp.float32)

    # Hoisted normalization:
    #   cos(normalize(p) @ W) == cos((p @ W) * rsqrt(max(|p|^2, eps^2)))
    # eps matches torch.nn.functional.normalize (1e-12 on the norm -> 1e-24 on
    # the sum of squares).  rsqrt lands on the EUP slot.
    inv_norm = jax.lax.rsqrt(jnp.maximum(sq, 1e-24))

    # TODO(synk): jnp.cos is the VALU-binding op on v6e/v7x; a bounded-range
    # polynomial or a bf16 elementwise tail would shorten that slot, but is
    # kept in f32 here (v5e has no bf16 VPU and the argument bound depends on
    # runtime weight magnitudes).
    out_ref[...] = jnp.cos(z * inv_norm).astype(out_ref.dtype)


@functools.partial(
    jax.jit,
    static_argnames=("kernel_size", "stride", "padding", "dilation",
                     "use_pad", "padding_mode", "transport_dtype"),
)
def quconv2d_mq(x, weights, *, kernel_size, stride, padding=0, dilation=1,
                use_pad=False, padding_mode="constant",
                transport_dtype=jnp.bfloat16):
    """JAX/Pallas equivalent of QuConv2D_MQ.forward.

    x:       (B, C, H, W) float32, NCHW
    weights: (C, kh*kw, num_qubits) float32 (per-channel surrogate q-weights)
    transport_dtype: dtype used to ship patches / weights over HBM (default
                     bf16: halves DMA bytes on this memory-bound kernel; all
                     accumulation, the normalization and the cos stay f32).
    returns: (B, C*num_qubits, OH, OW) float32 with the exact (scrambled)
             reshape semantics of the torch module's final `.reshape`.
    """
    B, C, H, W = x.shape
    kh = kw = kernel_size
    sh = sw = stride
    pad = padding
    dil = dilation
    K = kh * kw
    assert weights.shape[0] == C and weights.shape[1] == K, weights.shape
    Q = weights.shape[-1]
    CK, CQ = C * K, C * Q

    if use_pad:
        mode = {"constant": "constant", "reflect": "reflect",
                "replicate": "edge", "circular": "wrap"}[padding_mode]
        x = jnp.pad(x, ((0, 0), (0, 0), (pad, pad), (pad, pad)), mode=mode)

    oh = (H + 2 * pad - dil * (kh - 1) - 1) // sh + 1
    ow = (W + 2 * pad - dil * (kw - 1) - 1) // sw + 1
    P = oh * ow                                     # patches per batch element

    # --- glue: patch extraction directly in the (B, C*K, P) layout -----------
    # No (B<->C) transpose: K static strided slices stacked along a new axis,
    # then a contiguous (free) reshape.
    cols = []
    for ki in range(kh):
        for kj in range(kw):
            h0, w0 = ki * dil, kj * dil
            cols.append(x[:, :, h0:h0 + (oh - 1) * sh + 1:sh,
                              w0:w0 + (ow - 1) * sw + 1:sw])        # (B, C, oh, ow)
    patches = jnp.stack(cols, axis=2)                               # (B, C, K, oh, ow)
    patches = patches.reshape(B, CK, P).astype(transport_dtype)
    # TODO(synk): patch extraction could move fully inside the kernel
    # (BlockSpec window on raw x + unrolled strided slices) to also drop this
    # remaining wrapper-side materialization.

    # --- sublane alignment (8 for f32, 16 for bf16) ---------------------------
    in_itm = np.dtype(transport_dtype).itemsize
    sub = 8 * (4 // in_itm)                         # 8 (f32) / 16 (bf16)
    CKp = _round_up(CK, sub)
    CQp = _round_up(CQ, sub)

    # --- lane-tile sizing: big tiles, real per-step VMEM accounting ----------
    # Per lane-column bytes: double-buffered patch block, double-buffered f32
    # output block, plus in-kernel intermediates (patch^2 in transport dtype;
    # z, sq, inv_norm, cos result in f32).
    bytes_per_col = (2 * CKp * in_itm               # patch block, double-buffered
                     + CKp * in_itm                 # patch * patch
                     + 2 * CQp * 4                  # output block, double-buffered
                     + 4 * CQp * 4)                 # z, sq, inv_norm, cos (f32)
    vmem_budget = 32 * 1024 * 1024                  # v7x-safe (64 MiB/TC physical)
    p_t = 32768
    while p_t > 128 and bytes_per_col * p_t > vmem_budget:
        p_t //= 2
    p_t = min(p_t, _round_up(P, 128))
    # Keep >= 2 grid steps when there is only one batch element so the
    # "parallel" grid still feeds both of v7x's TensorCores.
    if B == 1 and P > 128 and p_t >= P:
        p_t = _round_up(_cdiv(P, 2), 128)
    P_pad = _round_up(P, p_t)

    if CKp > CK or P_pad > P:
        patches = jnp.pad(patches, ((0, 0), (0, CKp - CK), (0, P_pad - P)))

    # --- block-diagonal surrogate quantum weights (one real matmul) ----------
    w_f32 = weights.astype(jnp.float32)
    eye_c = jnp.eye(C, dtype=jnp.float32)
    # w_bd[c*Q + q, d*K + k] = W[c, k, q] if c == d else 0
    w_bd = jnp.einsum("cd,ckq->cqdk", eye_c, w_f32).reshape(CQ, CK)
    ones_bd = jnp.kron(eye_c, jnp.ones((Q, K), jnp.float32))        # (CQ, CK)
    if CQp > CQ or CKp > CK:
        w_bd = jnp.pad(w_bd, ((0, CQp - CQ), (0, CKp - CK)))
        ones_bd = jnp.pad(ones_bd, ((0, CQp - CQ), (0, CKp - CK)))
    w_bd = w_bd.astype(transport_dtype)
    ones_bd = ones_bd.astype(transport_dtype)

    # --- hot path: fused Pallas kernel, 2-D (batch, patch-tile) grid ---------
    # TODO(synk): if xprof still shows exposed DMA at these tile sizes, add
    # pipeline_mode=pl.Buffered(3) on the patches BlockSpec.
    out_big = pl.pallas_call(
        _quanv_fused_kernel,
        out_shape=jax.ShapeDtypeStruct((B, CQp, P_pad), jnp.float32),
        grid=(B, P_pad // p_t),
        in_specs=[
            pl.BlockSpec((None, CKp, p_t), lambda b, p: (b, 0, p)),
            pl.BlockSpec((CQp, CKp), lambda b, p: (0, 0)),
            pl.BlockSpec((CQp, CKp), lambda b, p: (0, 0)),
        ],
        out_specs=pl.BlockSpec((None, CQp, p_t), lambda b, p: (b, 0, p)),
        compiler_params=pltpu.CompilerParams(
            dimension_semantics=("parallel", "parallel"),
            vmem_limit_bytes=48 * 1024 * 1024),
    )(patches, w_bd, ones_bd)

    # --- epilogue: match the torch module's exact output layout --------------
    # The module reshapes its (B, C, OH, OW, Q) buffer to (B, C*Q, OH, OW), so
    # q must be the fastest-varying axis per (b, c) — that forces this one
    # transpose.  TODO(synk): if downstream only needs per-(c, q) feature maps
    # (not the module's exact scrambled reshape), this transpose can be
    # dropped and the reshape below becomes free.
    out = out_big[:, :CQ, :P].reshape(B, C, Q, oh, ow)
    out = jnp.transpose(out, (0, 1, 3, 4, 2))                       # (B, C, oh, ow, Q)
    return out.reshape(B, CQ, oh, ow)


if __name__ == "__main__":
    key = jax.random.PRNGKey(0)
    kx, kwgt = jax.random.split(key)

    # Small shapes consistent with the module: kernel_size^2 <= num_qubits ('n' embedding)
    B, C, H, W = 2, 4, 16, 16
    kernel_size, stride, num_qubits = 2, 2, 4

    x = jax.random.normal(kx, (B, C, H, W), dtype=jnp.float32)
    # Deterministic per-channel surrogate quantum weights: (C, kh*kw, num_qubits)
    weights = jax.random.uniform(
        kwgt, (C, kernel_size * kernel_size, num_qubits),
        dtype=jnp.float32, minval=0.0, maxval=2.0 * jnp.pi)

    out = quconv2d_mq(x, weights, kernel_size=kernel_size, stride=stride)
    out = jax.block_until_ready(out)

    oh = (H - (kernel_size - 1) - 1) // stride + 1
    ow = (W - (kernel_size - 1) - 1) // stride + 1
    assert out.shape == (B, C * num_qubits, oh, ow), out.shape
    assert bool(jnp.all(jnp.isfinite(out)))
    assert bool(jnp.all(jnp.abs(out) <= 1.0 + 1e-6))  # cos-expectation range

    print("KERNEL_OK")
</pallas_src>

<mosaic_0001>
module attributes {stable_mosaic.version = 11 : i64} {
  func.func @_quanv_fused_kernel(%arg0: i32, %arg1: i32, %arg2: memref<1x16x128xbf16, #tpu.memory_space<vmem>>, %arg3: memref<16x16xbf16, #tpu.memory_space<vmem>>, %arg4: memref<16x16xbf16, #tpu.memory_space<vmem>>, %arg5: memref<1x16x128xf32, #tpu.memory_space<vmem>>) attributes {dimension_semantics = [#tpu.dimension_semantics<parallel>, #tpu.dimension_semantics<parallel>], iteration_bounds = array<i64: 2, 1>, scalar_prefetch = 0 : i64, scratch_operands = 0 : i64, tpu.core_type = #tpu.core_type<tc>, window_params = [{transform_indices = @transform_0, window_bounds = array<i64: 1, 16, 128>}, {pipeline_mode = #tpu.pipeline_mode<synchronous>, transform_indices = @transform_1, window_bounds = array<i64: 16, 16>}, {pipeline_mode = #tpu.pipeline_mode<synchronous>, transform_indices = @transform_2, window_bounds = array<i64: 16, 16>}, {transform_indices = @transform_3, window_bounds = array<i64: 1, 16, 128>}]} {
    %c0 = arith.constant 0 : index
    %c0_0 = arith.constant 0 : index
    %c0_1 = arith.constant 0 : index
    %0 = vector.load %arg2[%c0, %c0_0, %c0_1] : memref<1x16x128xbf16, #tpu.memory_space<vmem>>, vector<1x16x128xbf16>
    %1 = vector.shape_cast %0 : vector<1x16x128xbf16> to vector<16x128xbf16>
    %c0_2 = arith.constant 0 : index
    %c0_3 = arith.constant 0 : index
    %2 = vector.load %arg3[%c0_2, %c0_3] : memref<16x16xbf16, #tpu.memory_space<vmem>>, vector<16x16xbf16>
    %cst = arith.constant dense<0.000000e+00> : vector<16x128xf32>
    %3 = tpu.matmul %2, %1, %cst {dimension_numbers = #tpu.dot_dimension_numbers<[1], [0], [0], [1], [0, 0, 1, 1], [], []>} : vector<16x16xbf16>, vector<16x128xbf16>, vector<16x128xf32> -> vector<16x128xf32>
    %c0_4 = arith.constant 0 : index
    %c0_5 = arith.constant 0 : index
    %4 = vector.load %arg4[%c0_4, %c0_5] : memref<16x16xbf16, #tpu.memory_space<vmem>>, vector<16x16xbf16>
    %5 = arith.mulf %1, %1 : vector<16x128xbf16>
    %cst_6 = arith.constant dense<0.000000e+00> : vector<16x128xf32>
    %6 = tpu.matmul %4, %5, %cst_6 {dimension_numbers = #tpu.dot_dimension_numbers<[1], [0], [0], [1], [0, 0, 1, 1], [], []>} : vector<16x16xbf16>, vector<16x128xbf16>, vector<16x128xf32> -> vector<16x128xf32>
    %cst_7 = arith.constant 1.000000e-24 : f32
    %7 = vector.broadcast %cst_7 : f32 to vector<16x128xf32>
    %8 = arith.maximumf %6, %7 : vector<16x128xf32>
    %9 = math.rsqrt %8 : vector<16x128xf32>
    %10 = arith.mulf %3, %9 : vector<16x128xf32>
    %11 = math.cos %10 : vector<16x128xf32>
    %c0_8 = arith.constant 0 : index
    %c0_9 = arith.constant 0 : index
    %c0_10 = arith.constant 0 : index
    %12 = vector.load %arg5[%c0_8, %c0_9, %c0_10] : memref<1x16x128xf32, #tpu.memory_space<vmem>>, vector<1x16x128xf32>
    %13 = vector.shape_cast %12 : vector<1x16x128xf32> to vector<16x128xf32>
    %14 = vector.shape_cast %11 : vector<16x128xf32> to vector<1x16x128xf32>
    tpu.vector_store %arg5[%c0_8, %c0_9, %c0_10], %14 {strides = array<i32>} : memref<1x16x128xf32, #tpu.memory_space<vmem>>, vector<1x16x128xf32>,
    return
  }
  func.func @transform_0(%arg0: i32, %arg1: i32) -> (i32, i32, i32) {
    %c0_i32 = arith.constant 0 : i32
    %c0_i32_0 = arith.constant 0 : i32
    return %arg0, %c0_i32, %arg1 : i32, i32, i32
  }
  func.func @transform_1(%arg0: i32, %arg1: i32) -> (i32, i32) {
    %c0_i32 = arith.constant 0 : i32
    %c0_i32_0 = arith.constant 0 : i32
    %c0_i32_1 = arith.constant 0 : i32
    return %c0_i32, %c0_i32_0 : i32, i32
  }
  func.func @transform_2(%arg0: i32, %arg1: i32) -> (i32, i32) {
    %c0_i32 = arith.constant 0 : i32
    %c0_i32_0 = arith.constant 0 : i32
    %c0_i32_1 = arith.constant 0 : i32
    return %c0_i32, %c0_i32_0 : i32, i32
  }
  func.func @transform_3(%arg0: i32, %arg1: i32) -> (i32, i32, i32) {
    %c0_i32 = arith.constant 0 : i32
    %c0_i32_0 = arith.constant 0 : i32
    return %arg0, %c0_i32, %arg1 : i32, i32, i32
  }
}

</mosaic_0001>

<llo_original>
// kernel: quconv2d_mq.1
$region0: #{quconv2d_mq.1}
  #allocation0 [shape = 'u32[]', space=smem, size = 0x4, offset = 0x4, fixed_abs, tag = 'smem constant byte address 0x4 - core index']
  #allocation1 [shape = 'u32[72,128]{1,0:T(1,128)}', space=vmem, size = 0x9000, scoped, tag = 'internal scratch']
  %s0 = inlined_call_operand.vmem [shape: bf16[2,16,128], index: 0, kind: input, shape index: {}]
  %s1 = inlined_call_operand.vmem [shape: bf16[16,16], index: 1, kind: input, shape index: {}]
  %s2 = inlined_call_operand.vmem [shape: bf16[16,16], index: 2, kind: input, shape index: {}]
  %s3 = inlined_call_operand.vmem [shape: f32[2,16,128], index: 3, kind: output, shape index: {}]
  %s4 = sld [smem:[#allocation0]]
  $region45: #{quconv2d_mq.1} parent=0
    _
  %s6 = ssub.s32 1, %s4
  %s7 = scalar_select 0, %s6, %s4
  loop: start=0, step=1, limit=4
  $region2: #{quconv2d_mq.1} parent=0 // loop_pre_header
    _
  $region3: #{quconv2d_mq.1} parent=0 // loop_header
    %s9 = sphi 0, %s13
    %p10 = scmp.ge.s32.totalorder %s9, 4
    %s16 = sphi 0, %s28
    %s17 = sphi 0, %s24
    %s18 = sphi 0, %s16
    %s19 = sphi 0, %s17
    %s20 = sphi 0, %s18
    %s21 = sphi 0, %s19
    %s33 = sphi 0, %s35
    %s36 = sphi 0, %s33
    %s37 = sphi 0, %s36
    %s53 = sphi 0, %s37
    %s57 = sphi 0, %s57
    %s59 = sphi 0, %s57
    %s60 = sphi 0, %s59
    %s74 = sphi 0, %s60
    %s78 = sphi 0, %s78
    %s80 = sphi 0, %s78
    %s81 = sphi 0, %s80
    %s95 = sphi 0, %s81
    %s103 = sphi 0, %s105
    %s106 = sphi 0, %s103
    %s107 = sphi 0, %s106
    %s123 = sphi 0, %s107
  $region4: #{quconv2d_mq.1} parent=0 // loop_header_branch
    %12 = sbr.rel (%p10) target = $region8
  $region5: #{quconv2d_mq.1} parent=0 // loop_body
    %s14 = ssub.s32 %s9, 1
    %s15 = ssub.s32 %s9, 2
    %s22 = sadd.s32 1, %s17
    %p23 = scmp.ge.s32.totalorder %s22, 1
    %s24 = scalar_select %p23, 0, %s22
    %s25 = sadd.s32 1, %s16
    %s26 = scalar_select %p23, %s25, %s16
    %p27 = scmp.ge.s32.totalorder %s26, 2
    %s28 = scalar_select %p27, 0, %s26
    %s29 = ssub.s32 %s16, %s28
    %s30 = ssub.s32 %s17, %s24
    %s31 = sor.u32 %s29, %s30
    %p32 = scmp.eq.s32.totalorder %s31, 0
    %s34 = sadd.s32 %s33, 1
    %s35 = scalar_select %p32, %s33, %s34
    %p38 = pneg %p32
    %p39 = scmp.eq.s32.totalorder %s9, 1
    %p40 = por %p38, %p39
    %p41 = scmp.ne.s32.totalorder %s33, %s36
    %p42 = scmp.eq.s32.totalorder %s9, 0
    %p43 = por %p41, %p42
    %p44 = scmp.ne.s32.totalorder %s33, %s36
    %p45 = scmp.eq.s32.totalorder %s14, 1
    %p46 = por %p44, %p45
    %p47 = scmp.ne.s32.totalorder %s36, %s37
    %p48 = scmp.eq.s32.totalorder %s14, 0
    %p49 = por %p47, %p48
    %p50 = scmp.ne.s32.totalorder %s36, %s37
    %p51 = scmp.eq.s32.totalorder %s15, 1
    %p52 = por %p50, %p51
    %p54 = scmp.ne.s32.totalorder %s37, %s53
    %p55 = scmp.eq.s32.totalorder %s15, 0
    %p56 = por %p54, %p55
    %s58 = sadd.s32 %s57, 1
    %p61 = scmp.eq.s32.totalorder %s9, 1
    %p62 = scmp.ne.s32.totalorder %s57, %s59
    %p63 = scmp.eq.s32.totalorder %s9, 0
    %p64 = por %p62, %p63
    %p65 = scmp.ne.s32.totalorder %s57, %s59
    %p66 = scmp.eq.s32.totalorder %s14, 1
    %p67 = por %p65, %p66
    %p68 = scmp.ne.s32.totalorder %s59, %s60
    %p69 = scmp.eq.s32.totalorder %s14, 0
    %p70 = por %p68, %p69
    %p71 = scmp.ne.s32.totalorder %s59, %s60
    %p72 = scmp.eq.s32.totalorder %s15, 1
    %p73 = por %p71, %p72
    %p75 = scmp.ne.s32.totalorder %s60, %s74
    %p76 = scmp.eq.s32.totalorder %s15, 0
    %p77 = por %p75, %p76
    %s79 = sadd.s32 %s78, 1
    %p82 = scmp.eq.s32.totalorder %s9, 1
    %p83 = scmp.ne.s32.totalorder %s78, %s80
    %p84 = scmp.eq.s32.totalorder %s9, 0
    %p85 = por %p83, %p84
    %p86 = scmp.ne.s32.totalorder %s78, %s80
    %p87 = scmp.eq.s32.totalorder %s14, 1
    %p88 = por %p86, %p87
    %p89 = scmp.ne.s32.totalorder %s80, %s81
    %p90 = scmp.eq.s32.totalorder %s14, 0
    %p91 = por %p89, %p90
    %p92 = scmp.ne.s32.totalorder %s80, %s81
    %p93 = scmp.eq.s32.totalorder %s15, 1
    %p94 = por %p92, %p93
    %p96 = scmp.ne.s32.totalorder %s81, %s95
    %p97 = scmp.eq.s32.totalorder %s15, 0
    %p98 = por %p96, %p97
    %s99 = ssub.s32 %s16, %s28
    %s100 = ssub.s32 %s17, %s24
    %s101 = sor.u32 %s99, %s100
    %p102 = scmp.eq.s32.totalorder %s101, 0
    %s104 = sadd.s32 %s103, 1
    %s105 = scalar_select %p102, %s103, %s104
    %p108 = pneg %p102
    %p109 = scmp.eq.s32.totalorder %s9, 1
    %p110 = por %p108, %p109
    %p111 = scmp.ne.s32.totalorder %s103, %s106
    %p112 = scmp.eq.s32.totalorder %s9, 0
    %p113 = por %p111, %p112
    %p114 = scmp.ne.s32.totalorder %s103, %s106
    %p115 = scmp.eq.s32.totalorder %s14, 1
    %p116 = por %p114, %p115
    %p117 = scmp.ne.s32.totalorder %s106, %s107
    %p118 = scmp.eq.s32.totalorder %s14, 0
    %p119 = por %p117, %p118
    %p120 = scmp.ne.s32.totalorder %s106, %s107
    %p121 = scmp.eq.s32.totalorder %s15, 1
    %p122 = por %p120, %p121
    %p124 = scmp.ne.s32.totalorder %s107, %s123
    %p125 = scmp.eq.s32.totalorder %s15, 0
    %p126 = por %p124, %p125
    %p127 = scmp.le.s32.totalorder 1, %s9
    %p128 = scmp.lt.s32.totalorder %s9, 3
    %p129 = pnand %p127, %p128
    %p130 = pneg %p129
    // Predicated region
    $region9: #{quconv2d_mq.1} parent=5 // pred_check
      _
    $region10: #{quconv2d_mq.1} parent=5 // pred_check_branch
      %132 = sbr.rel (%p129) target = $region12
    $region11: #{quconv2d_mq.1} parent=5 // pred_region
      %s133 = ssub.s32 %s9, 1
      // Predicated region
      $region13: #{quconv2d_mq.1} parent=11 // pred_check
        %p134 = pneg %p70
      $region14: #{quconv2d_mq.1} parent=11 // pred_check_branch
        %136 = sbr.rel (%p134) target = $region16
      $region15: #{quconv2d_mq.1} parent=11 // pred_region
        _
      $region16: #{quconv2d_mq.1} parent=11 // pred_fallthru
        _
      // Predicated region
      $region17: #{quconv2d_mq.1} parent=11 // pred_check
        %p137 = pneg %p91
      $region18: #{quconv2d_mq.1} parent=11 // pred_check_branch
        %139 = sbr.rel (%p137) target = $region20
      $region19: #{quconv2d_mq.1} parent=11 // pred_region
        _
      $region20: #{quconv2d_mq.1} parent=11 // pred_fallthru
        _
    $region12: #{quconv2d_mq.1} parent=5 // pred_fallthru
      _
    %p140 = scmp.lt.s32.totalorder %s9, 2
    // Predicated region
    $region21: #{quconv2d_mq.1} parent=5 // pred_check
      %p141 = pneg %p140
    $region22: #{quconv2d_mq.1} parent=5 // pred_check_branch
      %143 = sbr.rel (%p141) target = $region24
    $region23: #{quconv2d_mq.1} parent=5 // pred_region
      // Predicated region
      $region25: #{quconv2d_mq.1} parent=23 // pred_check
        %p144 = pneg %p43
      $region26: #{quconv2d_mq.1} parent=23 // pred_check_branch
        %146 = sbr.rel (%p144) target = $region28
      $region27: #{quconv2d_mq.1} parent=23 // pred_region
        %p147 = scmp.lt.s32.totalorder %s16, 1
        %s148 = scalar_select %p147, %s16, 1
        %p149 = scmp.lt.s32.totalorder %s17, 0
        %s150 = scalar_select %p149, %s17, 0
        %s151 = smul.addr %s148, 2
        %s152 = sadd.s32 %s150, %s151
        %s153 = smul.addr %s152, 4
        %s154 = scalar_lea.vmem %s0, %s153
      $region28: #{quconv2d_mq.1} parent=23 // pred_fallthru
        _
    $region24: #{quconv2d_mq.1} parent=5 // pred_fallthru
      _
    %p155 = scmp.le.s32.totalorder 1, %s9
    %p156 = scmp.lt.s32.totalorder %s9, 3
    %p157 = pnand %p155, %p156
    %p158 = pneg %p157
    // Predicated region
    $region29: #{quconv2d_mq.1} parent=5 // pred_check
      _
    $region30: #{quconv2d_mq.1} parent=5 // pred_check_branch
      %160 = sbr.rel (%p157) target = $region32
    $region31: #{quconv2d_mq.1} parent=5 // pred_region
      %s161 = ssub.s32 %s9, 1
      %p162 = scmp.lt.s32.totalorder %s18, 1
      %s163 = scalar_select %p162, %s18, 1
      %p164 = scmp.lt.s32.totalorder %s19, 0
      %s165 = scalar_select %p164, %s19, 0
      %s166 = smul.addr %s163, 2
      %s167 = sadd.s32 %s165, %s166
      %s168 = smul.addr %s167, 4
      %s169 = scalar_lea.vmem %s0, %s168
      %p170 = pneg %p49
      %p171 = pneg %p46
      %p172 = pneg %p70
      %p173 = pneg %p67
      %p174 = pneg %p91
      %p175 = pneg %p88
      %p176 = pneg %p119
      %p177 = pneg %p116
      %p178 = scmp.lt.s32.totalorder %s18, 1
      %s179 = scalar_select %p178, %s18, 1
      %p180 = scmp.lt.s32.totalorder %s19, 0
      %s181 = scalar_select %p180, %s19, 0
      %s182 = smul.addr %s179, 2
      %s183 = sadd.s32 %s181, %s182
      %s184 = smul.addr %s183, 8
      %s185 = scalar_lea.vmem %s3, %s184
      %p186 = scmp.lt.s32.totalorder %s18, 1
      %s187 = scalar_select %p186, %s18, 1
      %p188 = scmp.lt.s32.totalorder %s19, 0
      %s189 = scalar_select %p188, %s19, 0
      %s190 = smul.addr %s187, 2
      %s191 = sadd.s32 %s189, %s190
      %s192 = smul.addr %s191, 4
      %s193 = scalar_lea.vmem %s0, %s192
      %p194 = scmp.lt.s32.totalorder %s18, 1
      %s195 = scalar_select %p194, %s18, 1
      %p196 = scmp.lt.s32.totalorder %s19, 0
      %s197 = scalar_select %p196, %s19, 0
      %s198 = smul.addr %s195, 2
      %s199 = sadd.s32 %s197, %s198
      %s200 = smul.addr %s199, 8
      %s201 = scalar_lea.vmem %s3, %s200
      %v203 = vld [vmem:[%s193] sm:$0xf]
      %v204 = vld [vmem:[%s193 + $0x4] sm:$0xf]
      %v205 = vld [vmem:[%s1] sm:$0xf]
      %v206 = vld [vmem:[%s1 + $0x4] sm:$0xf]
      %v209 = vunpack.c.l.b16 %v205
      %v210 = vunpack.c.l.b16 %v206
      %v211 = vpack.c.b16 %v210, %v209
      %v214 = vunpack.c.l.b16 %v203
      %v215 = vunpack.c.l.b16 %v204
      %v216 = vpack.c.b16 %v215, %v214
      %vm218 = vcmask 130048
      %v220 = vsel %vm218, %v211, 0
      %222 = vmatpush.bf16.msra.mxu0 0
      %223 = vmatpush.bf16.msra.mxu0 0
      %224 = vmatpush.bf16.msra.mxu0 0
      %225 = vmatpush.bf16.msra.mxu0 0
      %226 = vmatpush.bf16.msra.mxu0 0
      %227 = vmatpush.bf16.msra.mxu0 0
      %228 = vmatpush.bf16.msra.mxu0 0
      %229 = vmatpush.bf16.msra.mxu0 %v216
      %230 = vmatmul.bf16.gmra.mxu0 %v220
      %v231 = vpop.f32.mrf.mxu0
      %v232 = vadd.f32 0.0, %v231
      %v233 = vpop.f32.mrf.mxu0
      %v234 = vadd.f32 0.0, %v233
      %235 = vdwg.mxu0
      %v236 = vld [vmem:[%s2] sm:$0xf]
      %v237 = vld [vmem:[%s2 + $0x4] sm:$0xf]
      %v238 = vunpack.c.l.bf16 %v203
      %v239 = vunpack.c.l.bf16 %v204
      %v240 = vmul.f32 %v238, %v238
      %v241 = vmul.f32 %v239, %v239
      %v242 = vpack.c.bf16 %v241, %v240
      %v245 = vunpack.c.l.b16 %v236
      %v246 = vunpack.c.l.b16 %v237
      %v247 = vpack.c.b16 %v246, %v245
      %v249 = vsel %vm218, %v247, 0
      %251 = vmatpush.bf16.msra.mxu0 0
      %252 = vmatpush.bf16.msra.mxu0 0
      %253 = vmatpush.bf16.msra.mxu0 0
      %254 = vmatpush.bf16.msra.mxu0 0
      %255 = vmatpush.bf16.msra.mxu0 0
      %256 = vmatpush.bf16.msra.mxu0 0
      %257 = vmatpush.bf16.msra.mxu0 0
      %258 = vmatpush.bf16.msra.mxu0 %v242
      %259 = vmatmul.bf16.gmra.mxu0 %v249
      %v260 = vpop.f32.mrf.mxu0
      %v261 = vadd.f32 0.0, %v260
      %v262 = vpop.f32.mrf.mxu0
      %v263 = vadd.f32 0.0, %v262
      %264 = vdwg.mxu0
      %v265 = vmax.f32 %v261, 1e-24
      %v266 = vmax.f32 %v263, 1e-24
      %v267 = vrsqrt.pop %v265
      %v268 = vmul.f32 %v267, %v265
      %v269 = vmul.f32 %v268, %v267
      %v270 = vmul.f32 0.5, %v269
      %v271 = vsub.f32 1.5, %v270
      %v272 = vmul.f32 %v267, %v271
      %vm273 = vweird.f32 %v265
      %vm274 = vweird.f32 %v267
      %vm275 = vmor %vm273, %vm274
      %v276 = vsel %vm275, %v267, %v272
      %v277 = vrsqrt.pop %v266
      %v278 = vmul.f32 %v277, %v266
      %v279 = vmul.f32 %v278, %v277
      %v280 = vmul.f32 0.5, %v279
      %v281 = vsub.f32 1.5, %v280
      %v282 = vmul.f32 %v277, %v281
      %vm283 = vweird.f32 %v266
      %vm284 = vweird.f32 %v277
      %vm285 = vmor %vm283, %vm284
      %v286 = vsel %vm285, %v277, %v282
      %v287 = vmul.f32 %v232, %v276
      %v288 = vmul.f32 %v234, %v286
      %v289 = vand.u32 2147483647, %v287
      %vm290 = vcmp.le.f32.partialorder %v289, 0.7853982
      %vm291 = vcmp.lt.s32.totalorder %v287, 0
      %v292 = vand.u32 %v287, 2139095040
      %v293 = vshrl.u32 %v292, 23
      %v294 = vsub.s32 %v293, 127
      %v295 = vand.u32 2147483647, %v287
      %v296 = vand.u32 %v295, 8388607
      %v297 = vor.u32 %v296, 8388608
      %v298 = vsub.s32 0, %v297
      %v299 = vadd.s32 %v294, 1
      %vm300 = vcmp.gt.s32.totalorder %v299, 0
      %v301 = vsel %vm300, %v299, 0
      %v302 = vshrl.u32 %v301, 5
      %v303 = vand.u32 %v301, 31
      %v304 = vsub.s32 32, %v303
      %v305 = vshrl.u32 683565275, %v304
      %v306 = vshll.u32 683565275, %v303
      %v307 = vshrl.u32 2475754826, %v304
      %v308 = vor.u32 %v306, %v307
      %v309 = vshll.u32 2475754826, %v303
      %v310 = vshrl.u32 2131351028, %v304
      %v311 = vor.u32 %v309, %v310
      %v312 = vshll.u32 2131351028, %v303
      %v313 = vshrl.u32 2102212464, %v304
      %v314 = vor.u32 %v312, %v313
      %v315 = vshll.u32 2102212464, %v303
      %v316 = vshrl.u32 920167782, %v304
      %v317 = vor.u32 %v315, %v316
      %v318 = vshll.u32 920167782, %v303
      %v319 = vshrl.u32 1326507024, %v304
      %v320 = vor.u32 %v318, %v319
      %vm321 = vcmp.lt.s32.totalorder %v302, 1
      %vm322 = vcmp.lt.s32.totalorder %v302, 2
      %vm323 = vcmp.lt.s32.totalorder %v302, 3
      %vm324 = vcmp.lt.s32.totalorder %v302, 4
      %v325 = vsel %vm321, %v305, %v308
      %v326 = vsel %vm324, %v314, 2102212464
      %v327 = vsel %vm323, %v311, %v326
      %v328 = vsel %vm322, %v325, %v327
      %v329 = vsel %vm321, %v308, %v311
      %v330 = vsel %vm324, %v317, 920167782
      %v331 = vsel %vm323, %v314, %v330
      %v332 = vsel %vm322, %v329, %v331
      %v333 = vsel %vm321, %v311, %v314
      %v334 = vsel %vm324, %v320, 1326507024
      %v335 = vsel %vm323, %v317, %v334
      %v336 = vsel %vm322, %v333, %v335
      %v337 = vshll.u32 %v297, 8
      %v338 = vand.u32 %v337, 65535
      %v339 = vshrl.u32 %v337, 16
      %v340 = vand.u32 %v336, 65535
      %v341 = vshrl.u32 %v336, 16
      %v342 = vmul.u32 %v338, %v340
      %v343 = vmul.u32 %v338, %v341
      %v344 = vmul.u32 %v339, %v340
      %v345 = vmul.u32 %v339, %v341
      %v346 = vshll.u32 %v343, 16
      %v347 = vshrl.u32 %v343, 16
      %v348 = vshll.u32 %v344, 16
      %v349 = vshrl.u32 %v344, 16
      %vm350 = vc.u32 %v342, %v346
      %v351 = vsel %vm350, 1, 0
      %v352 = vadd.s32 %v342, %v346
      %v353 = vadd.s32 %v345, %v351
      %vm354 = vc.u32 %v352, %v348
      %v355 = vsel %vm354, 1, 0
      %v356 = vadd.s32 %v352, %v348
      %v357 = vadd.s32 %v353, %v355
      %v358 = vadd.s32 %v357, %v347
      %v359 = vadd.s32 %v358, %v349
      %v360 = vand.u32 %v337, 65535
      %v361 = vshrl.u32 %v337, 16
      %v362 = vand.u32 %v332, 65535
      %v363 = vshrl.u32 %v332, 16
      %v364 = vmul.u32 %v360, %v362
      %v365 = vmul.u32 %v360, %v363
      %v366 = vmul.u32 %v361, %v362
      %v367 = vmul.u32 %v361, %v363
      %v368 = vshll.u32 %v365, 16
      %v369 = vshrl.u32 %v365, 16
      %v370 = vshll.u32 %v366, 16
      %v371 = vshrl.u32 %v366, 16
      %vm372 = vc.u32 %v364, %v368
      %v373 = vsel %vm372, 1, 0
      %v374 = vadd.s32 %v364, %v368
      %v375 = vadd.s32 %v367, %v373
      %vm376 = vc.u32 %v374, %v370
      %v377 = vsel %vm376, 1, 0
      %v378 = vadd.s32 %v374, %v370
      %v379 = vadd.s32 %v375, %v377
      %v380 = vadd.s32 %v379, %v369
      %v381 = vadd.s32 %v380, %v371
      %v382 = vmul.u32 %v337, %v328
      %v383 = vadd.s32 %v359, %v378
      %vm384 = vc.u32 %v359, %v378
      %v385 = vadd.s32 %v381, 1
      %v386 = vsel %vm384, %v385, %v381
      %v387 = vadd.s32 %v382, %v386
      %v388 = vadd.s32 %v387, 536870912
      %v389 = vshrl.u32 %v388, 30
      %v390 = vshll.u32 %v389, 30
      %v391 = vsub.s32 %v387, %v390
      %vm392 = vcmp.lt.s32.totalorder %v391, 0
      %v393 = vsub.s32 0, %v391
      %v394 = vsel %vm392, %v393, %v391
      %v395 = vclz %v394
      %v396 = vsub.s32 %v395, 2
      %vm397 = vcmp.gt.s32.totalorder 0, %v396
      %v398 = vsel %vm397, 0, %v396
      %v399 = vsub.s32 32, %v398
      %v400 = vshll.u32 %v391, %v398
      %v401 = vshrl.u32 %v383, %v399
      %v402 = vor.u32 %v400, %v401
      %v403 = vsub.s32 4294967266, %v398
      %v404 = vadd.s32 %v403, 127
      %v405 = vshll.u32 %v404, 23
      %v406 = vor.u32 4788187, %v405
      %v407 = vand.u32 2147483647, %v406
      %v409 = vcvt.s32.f32 %v402
      %v410 = vmul.f32 %v409, %v407
      %v411 = vxor.u32 %v410, 2147483648
      %v412 = vsel %vm291, %v411, %v410
      %v413 = vsub.s32 4, %v389
      %v414 = vsel %vm291, %v413, %v389
      %v415 = vsel %vm290, %v287, %v412
      %v416 = vsel %vm290, 0, %v414
      %v417 = vmul.f32 %v415, %v415
      %v418 = vmul.f32 %v417, -0.001358992
      %v419 = vadd.f32 %v418, 0.041655596
      %v420 = vmul.f32 %v417, %v419
      %v421 = vadd.f32 %v420, -0.4999988
      %v422 = vmul.f32 %v417, %v421
      %v423 = vadd.f32 1.0, %v422
      %v424 = vmul.f32 %v415, %v415
      %v425 = vmul.f32 %v424, -0.00019511016
      %v426 = vadd.f32 %v425, 0.008332121
      %v427 = vmul.f32 %v424, %v426
      %v428 = vadd.f32 %v427, -0.16666654
      %v429 = vmul.f32 %v424, %v428
      %v430 = vadd.f32 %v429, 1.0
      %v431 = vmul.f32 %v430, %v415
      %vm432 = vweird.f32 %v287
      %v433 = vand.u32 %v416, 3
      %vm434 = vcmp.lt.s32.totalorder %v433, 2
      %vm435 = vcmp.eq.s32.totalorder %v433, 0
      %v436 = vxor.u32 %v431, 2147483648
      %v437 = vsel %vm435, %v423, %v436
      %vm438 = vcmp.eq.s32.totalorder %v433, 2
      %v439 = vxor.u32 %v423, 2147483648
      %v440 = vsel %vm438, %v439, %v431
      %v441 = vsel %vm434, %v437, %v440
      %v442 = vsel %vm432, nan, %v441
      %v443 = vand.u32 2147483647, %v288
      %vm444 = vcmp.le.f32.partialorder %v443, 0.7853982
      %vm445 = vcmp.lt.s32.totalorder %v288, 0
      %v446 = vand.u32 %v288, 2139095040
      %v447 = vshrl.u32 %v446, 23
      %v448 = vsub.s32 %v447, 127
      %v449 = vand.u32 2147483647, %v288
      %v450 = vand.u32 %v449, 8388607
      %v451 = vor.u32 %v450, 8388608
      %v452 = vsub.s32 0, %v451
      %v453 = vadd.s32 %v448, 1
      %vm454 = vcmp.gt.s32.totalorder %v453, 0
      %v455 = vsel %vm454, %v453, 0
      %v456 = vshrl.u32 %v455, 5
      %v457 = vand.u32 %v455, 31
      %v458 = vsub.s32 32, %v457
      %v459 = vshrl.u32 683565275, %v458
      %v460 = vshll.u32 683565275, %v457
      %v461 = vshrl.u32 2475754826, %v458
      %v462 = vor.u32 %v460, %v461
      %v463 = vshll.u32 2475754826, %v457
      %v464 = vshrl.u32 2131351028, %v458
      %v465 = vor.u32 %v463, %v464
      %v466 = vshll.u32 2131351028, %v457
      %v467 = vshrl.u32 2102212464, %v458
      %v468 = vor.u32 %v466, %v467
      %v469 = vshll.u32 2102212464, %v457
      %v470 = vshrl.u32 920167782, %v458
      %v471 = vor.u32 %v469, %v470
      %v472 = vshll.u32 920167782, %v457
      %v473 = vshrl.u32 1326507024, %v458
      %v474 = vor.u32 %v472, %v473
      %vm475 = vcmp.lt.s32.totalorder %v456, 1
      %vm476 = vcmp.lt.s32.totalorder %v456, 2
      %vm477 = vcmp.lt.s32.totalorder %v456, 3
      %vm478 = vcmp.lt.s32.totalorder %v456, 4
      %v479 = vsel %vm475, %v459, %v462
      %v480 = vsel %vm478, %v468, 2102212464
      %v481 = vsel %vm477, %v465, %v480
      %v482 = vsel %vm476, %v479, %v481
      %v483 = vsel %vm475, %v462, %v465
      %v484 = vsel %vm478, %v471, 920167782
      %v485 = vsel %vm477, %v468, %v484
      %v486 = vsel %vm476, %v483, %v485
      %v487 = vsel %vm475, %v465, %v468
      %v488 = vsel %vm478, %v474, 1326507024
      %v489 = vsel %vm477, %v471, %v488
      %v490 = vsel %vm476, %v487, %v489
      %v491 = vshll.u32 %v451, 8
      %v492 = vand.u32 %v491, 65535
      %v493 = vshrl.u32 %v491, 16
      %v494 = vand.u32 %v490, 65535
      %v495 = vshrl.u32 %v490, 16
      %v496 = vmul.u32 %v492, %v494
      %v497 = vmul.u32 %v492, %v495
      %v498 = vmul.u32 %v493, %v494
      %v499 = vmul.u32 %v493, %v495
      %v500 = vshll.u32 %v497, 16
      %v501 = vshrl.u32 %v497, 16
      %v502 = vshll.u32 %v498, 16
      %v503 = vshrl.u32 %v498, 16
      %vm504 = vc.u32 %v496, %v500
      %v505 = vsel %vm504, 1, 0
      %v506 = vadd.s32 %v496, %v500
      %v507 = vadd.s32 %v499, %v505
      %vm508 = vc.u32 %v506, %v502
      %v509 = vsel %vm508, 1, 0
      %v510 = vadd.s32 %v506, %v502
      %v511 = vadd.s32 %v507, %v509
      %v512 = vadd.s32 %v511, %v501
      %v513 = vadd.s32 %v512, %v503
      %v514 = vand.u32 %v491, 65535
      %v515 = vshrl.u32 %v491, 16
      %v516 = vand.u32 %v486, 65535
      %v517 = vshrl.u32 %v486, 16
      %v518 = vmul.u32 %v514, %v516
      %v519 = vmul.u32 %v514, %v517
      %v520 = vmul.u32 %v515, %v516
      %v521 = vmul.u32 %v515, %v517
      %v522 = vshll.u32 %v519, 16
      %v523 = vshrl.u32 %v519, 16
      %v524 = vshll.u32 %v520, 16
      %v525 = vshrl.u32 %v520, 16
      %vm526 = vc.u32 %v518, %v522
      %v527 = vsel %vm526, 1, 0
      %v528 = vadd.s32 %v518, %v522
      %v529 = vadd.s32 %v521, %v527
      %vm530 = vc.u32 %v528, %v524
      %v531 = vsel %vm530, 1, 0
      %v532 = vadd.s32 %v528, %v524
      %v533 = vadd.s32 %v529, %v531
      %v534 = vadd.s32 %v533, %v523
      %v535 = vadd.s32 %v534, %v525
      %v536 = vmul.u32 %v491, %v482
      %v537 = vadd.s32 %v513, %v532
      %vm538 = vc.u32 %v513, %v532
      %v539 = vadd.s32 %v535, 1
      %v540 = vsel %vm538, %v539, %v535
      %v541 = vadd.s32 %v536, %v540
      %v542 = vadd.s32 %v541, 536870912
      %v543 = vshrl.u32 %v542, 30
      %v544 = vshll.u32 %v543, 30
      %v545 = vsub.s32 %v541, %v544
      %vm546 = vcmp.lt.s32.totalorder %v545, 0
      %v547 = vsub.s32 0, %v545
      %v548 = vsel %vm546, %v547, %v545
      %v549 = vclz %v548
      %v550 = vsub.s32 %v549, 2
      %vm551 = vcmp.gt.s32.totalorder 0, %v550
      %v552 = vsel %vm551, 0, %v550
      %v553 = vsub.s32 32, %v552
      %v554 = vshll.u32 %v545, %v552
      %v555 = vshrl.u32 %v537, %v553
      %v556 = vor.u32 %v554, %v555
      %v557 = vsub.s32 4294967266, %v552
      %v558 = vadd.s32 %v557, 127
      %v559 = vshll.u32 %v558, 23
      %v560 = vor.u32 4788187, %v559
      %v561 = vand.u32 2147483647, %v560
      %v563 = vcvt.s32.f32 %v556
      %v564 = vmul.f32 %v563, %v561
      %v565 = vxor.u32 %v564, 2147483648
      %v566 = vsel %vm445, %v565, %v564
      %v567 = vsub.s32 4, %v543
      %v568 = vsel %vm445, %v567, %v543
      %v569 = vsel %vm444, %v288, %v566
      %v570 = vsel %vm444, 0, %v568
      %v571 = vmul.f32 %v569, %v569
      %v572 = vmul.f32 %v571, -0.001358992
      %v573 = vadd.f32 %v572, 0.041655596
      %v574 = vmul.f32 %v571, %v573
      %v575 = vadd.f32 %v574, -0.4999988
      %v576 = vmul.f32 %v571, %v575
      %v577 = vadd.f32 1.0, %v576
      %v578 = vmul.f32 %v569, %v569
      %v579 = vmul.f32 %v578, -0.00019511016
      %v580 = vadd.f32 %v579, 0.008332121
      %v581 = vmul.f32 %v578, %v580
      %v582 = vadd.f32 %v581, -0.16666654
      %v583 = vmul.f32 %v578, %v582
      %v584 = vadd.f32 %v583, 1.0
      %v585 = vmul.f32 %v584, %v569
      %vm586 = vweird.f32 %v288
      %v587 = vand.u32 %v570, 3
      %vm588 = vcmp.lt.s32.totalorder %v587, 2
      %vm589 = vcmp.eq.s32.totalorder %v587, 0
      %v590 = vxor.u32 %v585, 2147483648
      %v591 = vsel %vm589, %v577, %v590
      %vm592 = vcmp.eq.s32.totalorder %v587, 2
      %v593 = vxor.u32 %v577, 2147483648
      %v594 = vsel %vm592, %v593, %v585
      %v595 = vsel %vm588, %v591, %v594
      %v596 = vsel %vm586, nan, %v595
      %597 = vst [vmem:[%s201] sm:$0xff] %v442
      %598 = vst [vmem:[%s201 + $0x8] sm:$0xff] %v596
      %p599 = scmp.lt.s32.totalorder %s18, 1
      %s600 = scalar_select %p599, %s18, 1
      %p601 = scmp.lt.s32.totalorder %s19, 0
      %s602 = scalar_select %p601, %s19, 0
      %s603 = smul.addr %s600, 2
      %s604 = sadd.s32 %s602, %s603
      %s605 = smul.addr %s604, 8
      %s606 = scalar_lea.vmem %s3, %s605
      // Predicated region
      $region33: #{quconv2d_mq.1} parent=31 // pred_check
        %p607 = pneg %p116
      $region34: #{quconv2d_mq.1} parent=31 // pred_check_branch
        %609 = sbr.rel (%p607) target = $region36
      $region35: #{quconv2d_mq.1} parent=31 // pred_region
        _
      $region36: #{quconv2d_mq.1} parent=31 // pred_fallthru
        _
    $region32: #{quconv2d_mq.1} parent=5 // pred_fallthru
      _
    %p610 = scmp.le.s32.totalorder 2, %s9
    // Predicated region
    $region37: #{quconv2d_mq.1} parent=5 // pred_check
      %p611 = pneg %p610
    $region38: #{quconv2d_mq.1} parent=5 // pred_check_branch
      %613 = sbr.rel (%p611) target = $region40
    $region39: #{quconv2d_mq.1} parent=5 // pred_region
      %s614 = ssub.s32 %s9, 2
      // Predicated region
      $region41: #{quconv2d_mq.1} parent=39 // pred_check
        %p615 = pneg %p122
      $region42: #{quconv2d_mq.1} parent=39 // pred_check_branch
        %617 = sbr.rel (%p615) target = $region44
      $region43: #{quconv2d_mq.1} parent=39 // pred_region
        %p618 = scmp.lt.s32.totalorder %s20, 1
        %s619 = scalar_select %p618, %s20, 1
        %p620 = scmp.lt.s32.totalorder %s21, 0
        %s621 = scalar_select %p620, %s21, 0
        %s622 = smul.addr %s619, 2
        %s623 = sadd.s32 %s621, %s622
        %s624 = smul.addr %s623, 8
        %s625 = scalar_lea.vmem %s3, %s624
      $region44: #{quconv2d_mq.1} parent=39 // pred_fallthru
        _
    $region40: #{quconv2d_mq.1} parent=5 // pred_fallthru
      _
  $region6: #{quconv2d_mq.1} parent=0 // loop_footer
    %s13 = sadd.s32 1, %s9
  $region7: #{quconv2d_mq.1} parent=0 // loop_footer_branch
    %8 = sbr.rel target = $region3
  $region8: #{quconv2d_mq.1} parent=0 // loop_exit
    _

</llo_original>
